<compile_context>
chip_gen: v5e
topology: v5e:2x2
jax: 0.10.0
libtpu: 0.0.40
codegen_flags: <defaults>
</compile_context>

<pallas_src>
import functools

import jax
import jax.numpy as jnp
from jax.experimental import pallas as pl
from jax.experimental.pallas import tpu as pltpu


_VMEM_TILE_BUDGET = 24 * 1024 * 1024   # bytes for double-buffered input+output tiles
_VMEM_LIMIT_BYTES = 32 * 1024 * 1024   # scoped VMEM limit; within physical VMEM on all gens


def _l2_normalize_kernel(x_ref, o_ref, *, eps):
    x = x_ref[...]
    # Accumulate the squared norm in f32 (matters for bf16/f16 inputs, free for f32).
    xf = x.astype(jnp.float32)
    sq_sum = jnp.sum(xf * xf, axis=-1, keepdims=True)
    # x / max(sqrt(ss), eps)  ==  x * rsqrt(max(ss, eps^2)); rsqrt runs on the EUP
    # (its own VLIW slot), avoiding a separate sqrt + divide on the VPU path.
    eps_f32 = jnp.float32(eps)
    inv_norm = jax.lax.rsqrt(jnp.maximum(sq_sum, eps_f32 * eps_f32))
    # Final multiply in the input dtype (bf16 stays bf16 on v6e/v7x VPUs).
    o_ref[...] = (x * inv_norm.astype(x.dtype)).astype(o_ref.dtype)


def _round_up(v, m):
    return ((v + m - 1) // m) * m


def _choose_block_rows(m, d, in_bytes, out_bytes):
    # Double-buffered input + output tiles must fit the VMEM tile budget.
    per_row_bytes = 2 * d * (in_bytes + out_bytes)
    vmem_rows = max(8, (_VMEM_TILE_BUDGET // per_row_bytes) // 8 * 8)
    # Keep at least 2 grid steps when the input allows it (v7x has 2 TensorCores).
    if m >= 16:
        vmem_rows = min(vmem_rows, _round_up(pl.cdiv(m, 2), 8))
    # Never larger than the (sublane-rounded) number of rows.
    return max(8, min(vmem_rows, _round_up(m, 8)))


def l2_normalize(x):
    """L2-normalize `x` along its last axis using a Pallas TPU kernel."""
    # eps mirrors the PyTorch module: 1e-6 for half tensors, else 1e-12.
    eps = 1e-6 if x.dtype == jnp.float16 else 1e-12

    orig_shape = x.shape
    d = orig_shape[-1]
    x2d = x.reshape(-1, d)
    m = x2d.shape[0]

    itemsize = x2d.dtype.itemsize
    block_rows = _choose_block_rows(m, d, itemsize, itemsize)
    grid = (pl.cdiv(m, block_rows),)  # partial last block handled by Pallas; no pad copy

    cost = pl.CostEstimate(
        flops=3 * m * d,              # square, reduce-add, scale
        transcendentals=m,            # one rsqrt per row
        bytes_accessed=2 * m * d * itemsize,
    )

    kernel = functools.partial(_l2_normalize_kernel, eps=eps)

    out = pl.pallas_call(
        kernel,
        out_shape=jax.ShapeDtypeStruct((m, d), x.dtype),
        grid_spec=pltpu.PrefetchScalarGridSpec(
            num_scalar_prefetch=0,
            grid=grid,
            in_specs=[pl.BlockSpec((block_rows, d), lambda i: (i, 0))],
            out_specs=pl.BlockSpec((block_rows, d), lambda i: (i, 0)),
        ),
        compiler_params=pltpu.CompilerParams(
            dimension_semantics=("parallel",),
            vmem_limit_bytes=_VMEM_LIMIT_BYTES,
        ),
        cost_estimate=cost,
    )(x2d)

    return out.reshape(orig_shape)


if __name__ == "__main__":
    key = jax.random.PRNGKey(0)
    # Small shape consistent with the module: (batch=2, seq=8, hidden=32),
    # normalization over the last (hidden) dim.
    x = jax.random.normal(key, (2, 8, 32), dtype=jnp.float32)

    y = jax.block_until_ready(l2_normalize(x))

    # Pure-JAX reference of F.normalize(p=2, dim=-1) semantics.
    eps = 1e-12
    norm = jnp.sqrt(jnp.sum(x.astype(jnp.float32) ** 2, axis=-1, keepdims=True))
    ref = x / jnp.maximum(norm, eps)
    assert jnp.allclose(y, ref, atol=1e-5, rtol=1e-5), "mismatch vs reference"

    print("KERNEL_OK")
</pallas_src>

<mosaic_0001>
module attributes {stable_mosaic.version = 11 : i64} {
  func.func @_l2_normalize_kernel(%arg0: i32, %arg1: memref<8x32xf32, #tpu.memory_space<vmem>>, %arg2: memref<8x32xf32, #tpu.memory_space<vmem>>) attributes {dimension_semantics = [#tpu.dimension_semantics<parallel>], iteration_bounds = array<i64: 2>, scalar_prefetch = 0 : i64, scratch_operands = 0 : i64, tpu.core_type = #tpu.core_type<tc>, window_params = [{transform_indices = @transform_0, window_bounds = array<i64: 8, 32>}, {transform_indices = @transform_1, window_bounds = array<i64: 8, 32>}]} {
    %c0 = arith.constant 0 : index
    %c0_0 = arith.constant 0 : index
    %0 = vector.load %arg1[%c0, %c0_0] : memref<8x32xf32, #tpu.memory_space<vmem>>, vector<8x32xf32>
    %1 = arith.mulf %0, %0 : vector<8x32xf32>
    %cst = arith.constant dense<0.000000e+00> : vector<8xf32>
    %2 = vector.multi_reduction <add>, %1, %cst [1] : vector<8x32xf32> to vector<8xf32>
    %3 = vector.shape_cast %2 : vector<8xf32> to vector<8x1xf32>
    %cst_1 = arith.constant 9.99999996E-13 : f32
    %cst_2 = arith.constant 9.99999996E-13 : f32
    %4 = arith.mulf %cst_1, %cst_2 : f32
    %5 = vector.broadcast %4 : f32 to vector<8x1xf32>
    %6 = arith.maximumf %3, %5 : vector<8x1xf32>
    %7 = math.rsqrt %6 : vector<8x1xf32>
    %8 = vector.broadcast %7 : vector<8x1xf32> to vector<8x32xf32>
    %9 = arith.mulf %0, %8 : vector<8x32xf32>
    %c0_3 = arith.constant 0 : index
    %c0_4 = arith.constant 0 : index
    %10 = vector.load %arg2[%c0_3, %c0_4] : memref<8x32xf32, #tpu.memory_space<vmem>>, vector<8x32xf32>
    tpu.vector_store %arg2[%c0_3, %c0_4], %9 {strides = array<i32>} : memref<8x32xf32, #tpu.memory_space<vmem>>, vector<8x32xf32>,
    return
  }
  func.func @transform_0(%arg0: i32) -> (i32, i32) {
    %c0_i32 = arith.constant 0 : i32
    %c0_i32_0 = arith.constant 0 : i32
    return %arg0, %c0_i32 : i32, i32
  }
  func.func @transform_1(%arg0: i32) -> (i32, i32) {
    %c0_i32 = arith.constant 0 : i32
    %c0_i32_0 = arith.constant 0 : i32
    return %arg0, %c0_i32 : i32, i32
  }
}

</mosaic_0001>

<llo_original>
// kernel: tpu_custom_call.1
$region0: #{tpu_custom_call.1}
  #allocation0 [shape = 'u32[]', space=smem, size = 0x4, offset = 0x4, fixed_abs, tag = 'smem constant byte address 0x4 - core index']
  #allocation1 [shape = 'u32[72,128]{1,0:T(1,128)}', space=vmem, size = 0x9000, scoped, tag = 'internal scratch']
  %s0 = inlined_call_operand.hbm [shape: f32[16,32], index: 0, kind: input, shape index: {}]
  %s1 = inlined_call_operand.hbm [shape: f32[16,32], index: 1, kind: output, shape index: {}]
  %s2 = sld [smem:[#allocation0]]
  $region41: #{tpu_custom_call.1} parent=0
    _
  %s4 = ssub.s32 1, %s2
  %s5 = scalar_select 0, %s4, %s2
  $region1: #{tpu_custom_call.1} parent=0
    #allocation2 [shape = 'u8[8192]{0}', space=vmem, size = 0x2000, scoped, tag = 'input window, operand 0']
    #allocation3 [shape = 's32[2]{0}', space=sflag, size = 0x8, scoped, tag = 'scoped memory for tpu_custom_call.1']
    #allocation4 [shape = 's32[2]{0}', space=sflag, size = 0x8, scoped, tag = 'scoped memory for tpu_custom_call.1']
    #allocation5 [shape = 'u8[8192]{0}', space=vmem, size = 0x2000, scoped, tag = 'output window, operand 0']
    %6 = vsyncpa [#allocation3], 0
    %s7 = scalar_lea.sflag [#allocation3], 1
    %8 = vsyncpa %s7, 0
    %9 = vsyncpa [#allocation4], 0
    %s10 = scalar_lea.sflag [#allocation4], 1
    %11 = vsyncpa %s10, 0
    loop: start=0, step=1, limit=4
    $region2: #{tpu_custom_call.1} parent=1 // loop_pre_header
      _
    $region3: #{tpu_custom_call.1} parent=1 // loop_header
      %s13 = sphi 0, %s17
      %p14 = scmp.ge.s32.totalorder %s13, 4
      %s23 = sphi 0, %s25
      %s26 = sphi 0, %s23
      %s27 = sphi 0, %s26
      %s43 = sphi 0, %s27
      %s49 = sphi 0, %s51
      %s52 = sphi 0, %s49
      %s53 = sphi 0, %s52
      %s69 = sphi 0, %s53
    $region4: #{tpu_custom_call.1} parent=1 // loop_header_branch
      %16 = sbr.rel (%p14) target = $region8
    $region5: #{tpu_custom_call.1} parent=1 // loop_body
      %s18 = ssub.s32 %s13, 1
      %s19 = ssub.s32 %s13, 2
      %s20 = sadd.s32 %s13, 1
      %s21 = ssub.s32 %s13, %s20
      %p22 = scmp.eq.s32.totalorder %s21, 0
      %s24 = sadd.s32 %s23, 1
      %s25 = scalar_select %p22, %s23, %s24
      %p28 = pneg %p22
      %p29 = scmp.eq.s32.totalorder %s13, 1
      %p30 = por %p28, %p29
      %p31 = scmp.ne.s32.totalorder %s23, %s26
      %p32 = scmp.eq.s32.totalorder %s13, 0
      %p33 = por %p31, %p32
      %p34 = scmp.ne.s32.totalorder %s23, %s26
      %p35 = scmp.eq.s32.totalorder %s18, 1
      %p36 = por %p34, %p35
      %p37 = scmp.ne.s32.totalorder %s26, %s27
      %p38 = scmp.eq.s32.totalorder %s18, 0
      %p39 = por %p37, %p38
      %p40 = scmp.ne.s32.totalorder %s26, %s27
      %p41 = scmp.eq.s32.totalorder %s19, 1
      %p42 = por %p40, %p41
      %p44 = scmp.ne.s32.totalorder %s27, %s43
      %p45 = scmp.eq.s32.totalorder %s19, 0
      %p46 = por %p44, %p45
      %s47 = ssub.s32 %s13, %s20
      %p48 = scmp.eq.s32.totalorder %s47, 0
      %s50 = sadd.s32 %s49, 1
      %s51 = scalar_select %p48, %s49, %s50
      %p54 = pneg %p48
      %p55 = scmp.eq.s32.totalorder %s13, 1
      %p56 = por %p54, %p55
      %p57 = scmp.ne.s32.totalorder %s49, %s52
      %p58 = scmp.eq.s32.totalorder %s13, 0
      %p59 = por %p57, %p58
      %p60 = scmp.ne.s32.totalorder %s49, %s52
      %p61 = scmp.eq.s32.totalorder %s18, 1
      %p62 = por %p60, %p61
      %p63 = scmp.ne.s32.totalorder %s52, %s53
      %p64 = scmp.eq.s32.totalorder %s18, 0
      %p65 = por %p63, %p64
      %p66 = scmp.ne.s32.totalorder %s52, %s53
      %p67 = scmp.eq.s32.totalorder %s19, 1
      %p68 = por %p66, %p67
      %p70 = scmp.ne.s32.totalorder %s53, %s69
      %p71 = scmp.eq.s32.totalorder %s19, 0
      %p72 = por %p70, %p71
      %p73 = scmp.le.s32.totalorder 1, %s13
      %p74 = scmp.lt.s32.totalorder %s13, 3
      %p75 = pnand %p73, %p74
      %p76 = pneg %p75
      // Predicated region
      $region9: #{tpu_custom_call.1} parent=5 // pred_check
        _
      $region10: #{tpu_custom_call.1} parent=5 // pred_check_branch
        %78 = sbr.rel (%p75) target = $region12
      $region11: #{tpu_custom_call.1} parent=5 // pred_region
        %s79 = ssub.s32 %s13, 1
      $region12: #{tpu_custom_call.1} parent=5 // pred_fallthru
        _
      %p80 = scmp.lt.s32.totalorder %s13, 2
      // Predicated region
      $region13: #{tpu_custom_call.1} parent=5 // pred_check
        %p81 = pneg %p80
      $region14: #{tpu_custom_call.1} parent=5 // pred_check_branch
        %83 = sbr.rel (%p81) target = $region16
      $region15: #{tpu_custom_call.1} parent=5 // pred_region
        // Predicated region
        $region17: #{tpu_custom_call.1} parent=15 // pred_check
          %p84 = pneg %p33
        $region18: #{tpu_custom_call.1} parent=15 // pred_check_branch
          %86 = sbr.rel (%p84) target = $region20
        $region19: #{tpu_custom_call.1} parent=15 // pred_region
          %s87 = sand.u32 %s23, 1
          %s88 = scalar_lea.sflag [#allocation3], %s87
          %s89 = sand.u32 %s23, 1
          %s90 = smul.addr %s89, 8
          %s91 = scalar_lea.vmem [#allocation2], %s90
          %93 = vsyncadd %s88, 0
          %s94 = smul.addr %s13, 8
          %s95 = scalar_lea.hbm %s0, %s94
          %s97 = sshll.u32 %s95, 4
          %s98 = int_to_ptr.hbm [resolvable:$true] %s97
          %s99 = sshll.u32 %s91, 4
          %s100 = int_to_ptr.vmem [resolvable:$true] %s99
          %102 = dma.hbm_to_vmem [thread:$0]  %s98, 128, %s100, %s88
        $region20: #{tpu_custom_call.1} parent=15 // pred_fallthru
          _
      $region16: #{tpu_custom_call.1} parent=5 // pred_fallthru
        _
      %p103 = scmp.le.s32.totalorder 1, %s13
      %p104 = scmp.lt.s32.totalorder %s13, 3
      %p105 = pnand %p103, %p104
      %p106 = pneg %p105
      // Predicated region
      $region21: #{tpu_custom_call.1} parent=5 // pred_check
        _
      $region22: #{tpu_custom_call.1} parent=5 // pred_check_branch
        %108 = sbr.rel (%p105) target = $region24
      $region23: #{tpu_custom_call.1} parent=5 // pred_region
        %s109 = ssub.s32 %s13, 1
        %s110 = sand.u32 %s26, 1
        %s111 = scalar_lea.sflag [#allocation3], %s110
        %s112 = sand.u32 %s26, 1
        %s113 = smul.addr %s112, 8
        %s114 = scalar_lea.vmem [#allocation2], %s113
        // Predicated region
        $region25: #{tpu_custom_call.1} parent=23 // pred_check
          %p115 = pneg %p39
        $region26: #{tpu_custom_call.1} parent=23 // pred_check_branch
          %117 = sbr.rel (%p115) target = $region28
        $region27: #{tpu_custom_call.1} parent=23 // pred_region
          %119 = dma.done %s111, 128
        $region28: #{tpu_custom_call.1} parent=23 // pred_fallthru
          _
        %s120 = sand.u32 %s26, 1
        %s121 = scalar_lea.sflag [#allocation3], %s120
        %s122 = sand.u32 %s26, 1
        %s123 = smul.addr %s122, 8
        %s124 = scalar_lea.vmem [#allocation2], %s123
        %p125 = pneg %p39
        %p126 = pneg %p36
        %p127 = pneg %p65
        %p128 = pneg %p62
        %s129 = sand.u32 %s52, 1
        %s130 = scalar_lea.sflag [#allocation4], %s129
        %s131 = sand.u32 %s52, 1
        %s132 = smul.addr %s131, 8
        %s133 = scalar_lea.vmem [#allocation5], %s132
        %v134 = vld [vmem:[%s114] sm:$0xff]
        %v135 = vmul.f32 %v134, %v134
        %vm136 = vcmask 261120
        %v137 = vsel %vm136, %v135, 0.0
        %138 = vadd.xlane.f32.xlu0 %v137
        %v139 = vpop.xlane.xlu0 %138
        %v140 = vmax.f32 %v139, 1e-24
        %v141 = vrsqrt.pop %v140
        %v142 = vmul.f32 %v141, %v140
        %v143 = vmul.f32 %v142, %v141
        %v144 = vmul.f32 0.5, %v143
        %v145 = vsub.f32 1.5, %v144
        %v146 = vmul.f32 %v141, %v145
        %vm147 = vweird.f32 %v140
        %vm148 = vweird.f32 %v141
        %vm149 = vmor %vm147, %vm148
        %v150 = vsel %vm149, %v141, %v146
        %v151 = vmul.f32 %v134, %v150
        %152 = vst.msk [vmem:[%s133] sm:$0xff] %vm136, %v151
        %s153 = sand.u32 %s52, 1
        %s154 = scalar_lea.sflag [#allocation4], %s153
        %s155 = sand.u32 %s52, 1
        %s156 = smul.addr %s155, 8
        %s157 = scalar_lea.vmem [#allocation5], %s156
        // Predicated region
        $region29: #{tpu_custom_call.1} parent=23 // pred_check
          %p158 = pneg %p62
        $region30: #{tpu_custom_call.1} parent=23 // pred_check_branch
          %160 = sbr.rel (%p158) target = $region32
        $region31: #{tpu_custom_call.1} parent=23 // pred_region
          %162 = vsyncadd %s154, 0
          %s163 = smul.addr %s18, 8
          %s164 = scalar_lea.hbm %s1, %s163
          %s166 = sshll.u32 %s157, 4
          %s167 = int_to_ptr.vmem [resolvable:$true] %s166
          %s168 = sshll.u32 %s164, 4
          %s169 = int_to_ptr.hbm [resolvable:$true] %s168
          %171 = dma.vmem_to_hbm [thread:$0]  %s167, 128, %s169, %s154
        $region32: #{tpu_custom_call.1} parent=23 // pred_fallthru
          _
      $region24: #{tpu_custom_call.1} parent=5 // pred_fallthru
        _
      %p172 = scmp.le.s32.totalorder 2, %s13
      // Predicated region
      $region33: #{tpu_custom_call.1} parent=5 // pred_check
        %p173 = pneg %p172
      $region34: #{tpu_custom_call.1} parent=5 // pred_check_branch
        %175 = sbr.rel (%p173) target = $region36
      $region35: #{tpu_custom_call.1} parent=5 // pred_region
        %s176 = ssub.s32 %s13, 2
        // Predicated region
        $region37: #{tpu_custom_call.1} parent=35 // pred_check
          %p177 = pneg %p68
        $region38: #{tpu_custom_call.1} parent=35 // pred_check_branch
          %179 = sbr.rel (%p177) target = $region40
        $region39: #{tpu_custom_call.1} parent=35 // pred_region
          %s180 = sand.u32 %s53, 1
          %s181 = scalar_lea.sflag [#allocation4], %s180
          %s182 = sand.u32 %s53, 1
          %s183 = smul.addr %s182, 8
          %s184 = scalar_lea.vmem [#allocation5], %s183
          %186 = dma.done %s181, 128
        $region40: #{tpu_custom_call.1} parent=35 // pred_fallthru
          _
      $region36: #{tpu_custom_call.1} parent=5 // pred_fallthru
        _
    $region6: #{tpu_custom_call.1} parent=1 // loop_footer
      %s17 = sadd.s32 1, %s13
    $region7: #{tpu_custom_call.1} parent=1 // loop_footer_branch
      %12 = sbr.rel target = $region3
    $region8: #{tpu_custom_call.1} parent=1 // loop_exit
      _
    %187 = vsyncpa [#allocation3], 1
    %s188 = scalar_lea.sflag [#allocation3], 1
    %189 = vsyncpa %s188, 1
    %190 = vsyncpa [#allocation4], 1
    %s191 = scalar_lea.sflag [#allocation4], 1
    %192 = vsyncpa %s191, 1

</llo_original>
